<compile_context>
chip_gen: v6e
topology: v6e:2x2x1
jax: 0.10.0
libtpu: 0.0.40
codegen_flags: <defaults>
</compile_context>

<pallas_src>
import functools
import math

import jax
import jax.numpy as jnp
from jax.experimental import pallas as pl
from jax.experimental.pallas import tpu as pltpu

IN_FEATURES = 10
HIDDEN = 64
OUT_FEATURES = 128

# 4096 rows/step: double-buffered x (bf16, lane-padded) + out blocks plus f32 intermediates are
# ~10-12 MiB, well inside v7x's 64 MiB/TC, while steps are long enough to hide per-step overhead.
TILE_R = 4096


def _round_up(n, m):
    return ((n + m - 1) // m) * m


def _mlp_kernel(x_ref, w1_ref, b1_ref, w2_ref, b2_ref, o_ref):
    # x_ref: (tile, IN) bf16   w1_ref: (IN, H) bf16   b1_ref: (1, H) f32
    # w2_ref: (H, OUT) bf16    b2_ref: (1, OUT) f32   o_ref: (tile, OUT) f32|bf16
    # MXU fast path: bf16 operands, f32 accumulation.
    h = jnp.dot(x_ref[...], w1_ref[...], preferred_element_type=jnp.float32)
    h = jnp.maximum(h + b1_ref[...], 0.0)            # bias + ReLU on the VPU in f32
    y = jnp.dot(h.astype(jnp.bfloat16), w2_ref[...],
                preferred_element_type=jnp.float32)
    o_ref[...] = (y + b2_ref[...]).astype(o_ref.dtype)


@functools.partial(jax.jit, static_argnames=("tile_r", "out_dtype"))
def timeseries_adapter_forward(x, w1, b1, w2, b2, *, tile_r=TILE_R, out_dtype=None):
    """x: (..., in_features). Returns same leading dims with last dim OUT_FEATURES.

    out_dtype: output dtype; defaults to x.dtype (f32, matching the torch module). Pass
    jnp.bfloat16 to halve the dominant HBM writeback when downstream tolerates it.
    """
    orig_shape = x.shape
    rows = math.prod(orig_shape[:-1])  # == 1 for a 1-D input
    out_dtype = jnp.dtype(out_dtype if out_dtype is not None else x.dtype)

    # bf16 x in HBM: halves input DMA and the lane-padded VMEM x block; numerically free
    # because the matmul already runs on bf16 operands.
    x2d = x.reshape(rows, orig_shape[-1]).astype(jnp.bfloat16)

    # --- Tile / padding policy (bounds padding waste to < 16 rows per tile) -------------
    tile_r = max(16, (tile_r // 16) * 16)            # bf16 sublane packing = 16
    num_tiles = pl.cdiv(rows, tile_r)
    if num_tiles > 1:
        num_tiles = _round_up(num_tiles, 2)          # even grid -> balanced across v7x's 2 TCs
    tile = _round_up(pl.cdiv(rows, num_tiles), 16)
    padded_rows = num_tiles * tile
    if padded_rows != rows:
        x2d = jnp.pad(x2d, ((0, padded_rows - rows), (0, 0)))
    grid = (num_tiles,)

    # bf16 weights for the MXU; biases stay f32 (added in f32 on the VPU).
    w1b = w1.astype(jnp.bfloat16)
    w2b = w2.astype(jnp.bfloat16)

    # --- Scoped VMEM sized from the actual blocks (double-buffered) + intermediates -----
    out_itemsize = out_dtype.itemsize
    x_block_bytes = tile * 128 * 2                   # bf16, lane-padded 10 -> 128
    out_block_bytes = tile * OUT_FEATURES * out_itemsize
    inter_bytes = tile * (HIDDEN * 4 + HIDDEN * 2 + OUT_FEATURES * 4)  # h(f32)+h(bf16)+y(f32)
    weight_bytes = 2 * 2 * (IN_FEATURES * HIDDEN + HIDDEN * OUT_FEATURES) \
        + 2 * 4 * (HIDDEN + OUT_FEATURES)
    vmem_bytes = 2 * (x_block_bytes + out_block_bytes) + inter_bytes + weight_bytes + (2 << 20)
    vmem_limit = min(max(vmem_bytes, 16 << 20), 48 << 20)   # stay well under v7x's 64 MiB/TC

    cost = pl.CostEstimate(
        flops=2 * padded_rows * (IN_FEATURES * HIDDEN + HIDDEN * OUT_FEATURES),
        transcendentals=0,
        bytes_accessed=(padded_rows * IN_FEATURES * 2
                        + padded_rows * OUT_FEATURES * out_itemsize
                        + w1b.size * 2 + w2b.size * 2
                        + b1.size * 4 + b2.size * 4),
    )

    out2d = pl.pallas_call(
        _mlp_kernel,
        out_shape=jax.ShapeDtypeStruct((padded_rows, OUT_FEATURES), out_dtype),
        grid_spec=pltpu.PrefetchScalarGridSpec(
            num_scalar_prefetch=0,
            grid=grid,
            in_specs=[
                pl.BlockSpec((tile, IN_FEATURES), lambda i: (i, 0)),
                pl.BlockSpec((IN_FEATURES, HIDDEN), lambda i: (0, 0)),
                pl.BlockSpec((1, HIDDEN), lambda i: (0, 0)),
                pl.BlockSpec((HIDDEN, OUT_FEATURES), lambda i: (0, 0)),
                pl.BlockSpec((1, OUT_FEATURES), lambda i: (0, 0)),
            ],
            out_specs=pl.BlockSpec((tile, OUT_FEATURES), lambda i: (i, 0)),
        ),
        compiler_params=pltpu.CompilerParams(
            dimension_semantics=("parallel",),       # row tiles independent -> both TCs on v7x
            vmem_limit_bytes=vmem_limit,
        ),
        cost_estimate=cost,
    )(x2d, w1b, b1, w2b, b2)

    return out2d[:rows].reshape(*orig_shape[:-1], OUT_FEATURES)


def init_params(key):
    """Deterministic init mimicking nn.Linear defaults (uniform +/- 1/sqrt(fan_in))."""
    k1, k2, k3, k4 = jax.random.split(key, 4)
    bound1 = 1.0 / jnp.sqrt(IN_FEATURES)
    bound2 = 1.0 / jnp.sqrt(HIDDEN)
    # Stored as [in, out] (transposed relative to torch's [out, in]) for direct matmul.
    w1 = jax.random.uniform(k1, (IN_FEATURES, HIDDEN), jnp.float32, -bound1, bound1)
    b1 = jax.random.uniform(k2, (1, HIDDEN), jnp.float32, -bound1, bound1)
    w2 = jax.random.uniform(k3, (HIDDEN, OUT_FEATURES), jnp.float32, -bound2, bound2)
    b2 = jax.random.uniform(k4, (1, OUT_FEATURES), jnp.float32, -bound2, bound2)
    return w1, b1, w2, b2


if __name__ == "__main__":
    key = jax.random.PRNGKey(0)
    k_params, k_x1, k_x2 = jax.random.split(key, 3)
    w1, b1, w2, b2 = init_params(k_params)

    def ref_fn(x):
        return jnp.maximum(x @ w1 + b1[0], 0.0) @ w2 + b2[0]

    # Small shape consistent with the module: batch=2, seq=8, in_features=10.
    x1 = jax.random.normal(k_x1, (2, 8, IN_FEATURES), jnp.float32)
    out1 = jax.block_until_ready(timeseries_adapter_forward(x1, w1, b1, w2, b2))
    assert out1.shape == (2, 8, OUT_FEATURES), out1.shape
    assert out1.dtype == jnp.float32, out1.dtype
    # bf16 matmul operands (f32 accumulation) -> loosened tolerance vs pure-f32 reference.
    assert jnp.allclose(out1, ref_fn(x1), atol=5e-2, rtol=5e-2)

    # Exercise the multi-tile path: 1200 rows @ tile_r=512 -> even grid of 4, tile=304,
    # only 16 padded rows (old policy padded 28%).
    x2 = jax.random.normal(k_x2, (4, 300, IN_FEATURES), jnp.float32)
    out2 = jax.block_until_ready(
        timeseries_adapter_forward(x2, w1, b1, w2, b2, tile_r=512))
    assert out2.shape == (4, 300, OUT_FEATURES), out2.shape
    assert jnp.allclose(out2, ref_fn(x2), atol=5e-2, rtol=5e-2)

    # Exercise the bf16-output fast path (halves the dominant HBM writeback).
    out3 = jax.block_until_ready(
        timeseries_adapter_forward(x1, w1, b1, w2, b2, out_dtype=jnp.bfloat16))
    assert out3.dtype == jnp.bfloat16, out3.dtype
    assert jnp.allclose(out3.astype(jnp.float32), ref_fn(x1), atol=1e-1, rtol=1e-1)

    print("KERNEL_OK")
</pallas_src>

<mosaic_0001>
module attributes {stable_mosaic.version = 11 : i64} {
  func.func @_mlp_kernel(%arg0: i32, %arg1: memref<16x10xbf16, #tpu.memory_space<vmem>>, %arg2: memref<10x64xbf16, #tpu.memory_space<vmem>>, %arg3: memref<1x64xf32, #tpu.memory_space<vmem>>, %arg4: memref<64x128xbf16, #tpu.memory_space<vmem>>, %arg5: memref<1x128xf32, #tpu.memory_space<vmem>>, %arg6: memref<16x128xf32, #tpu.memory_space<vmem>>) attributes {dimension_semantics = [#tpu.dimension_semantics<parallel>], iteration_bounds = array<i64: 1>, scalar_prefetch = 0 : i64, scratch_operands = 0 : i64, tpu.core_type = #tpu.core_type<tc>, window_params = [{transform_indices = @transform_0, window_bounds = array<i64: 16, 10>}, {pipeline_mode = #tpu.pipeline_mode<synchronous>, transform_indices = @transform_1, window_bounds = array<i64: 10, 64>}, {pipeline_mode = #tpu.pipeline_mode<synchronous>, transform_indices = @transform_2, window_bounds = array<i64: 1, 64>}, {pipeline_mode = #tpu.pipeline_mode<synchronous>, transform_indices = @transform_3, window_bounds = array<i64: 64, 128>}, {pipeline_mode = #tpu.pipeline_mode<synchronous>, transform_indices = @transform_4, window_bounds = array<i64: 1, 128>}, {transform_indices = @transform_5, window_bounds = array<i64: 16, 128>}]} {
    %c0 = arith.constant 0 : index
    %c0_0 = arith.constant 0 : index
    %0 = vector.load %arg1[%c0, %c0_0] : memref<16x10xbf16, #tpu.memory_space<vmem>>, vector<16x10xbf16>
    %c0_1 = arith.constant 0 : index
    %c0_2 = arith.constant 0 : index
    %1 = vector.load %arg2[%c0_1, %c0_2] : memref<10x64xbf16, #tpu.memory_space<vmem>>, vector<10x64xbf16>
    %cst = arith.constant dense<0.000000e+00> : vector<16x64xf32>
    %2 = tpu.matmul %0, %1, %cst {dimension_numbers = #tpu.dot_dimension_numbers<[1], [0], [0], [1], [0, 0, 1, 1], [], []>} : vector<16x10xbf16>, vector<10x64xbf16>, vector<16x64xf32> -> vector<16x64xf32>
    %c0_3 = arith.constant 0 : index
    %c0_4 = arith.constant 0 : index
    %3 = vector.load %arg3[%c0_3, %c0_4] : memref<1x64xf32, #tpu.memory_space<vmem>>, vector<1x64xf32>
    %4 = vector.broadcast %3 : vector<1x64xf32> to vector<16x64xf32>
    %5 = arith.addf %2, %4 : vector<16x64xf32>
    %cst_5 = arith.constant 0.000000e+00 : f32
    %6 = vector.broadcast %cst_5 : f32 to vector<16x64xf32>
    %7 = arith.maximumf %5, %6 : vector<16x64xf32>
    %8 = arith.truncf %7 : vector<16x64xf32> to vector<16x64xbf16>
    %c0_6 = arith.constant 0 : index
    %c0_7 = arith.constant 0 : index
    %9 = vector.load %arg4[%c0_6, %c0_7] : memref<64x128xbf16, #tpu.memory_space<vmem>>, vector<64x128xbf16>
    %cst_8 = arith.constant dense<0.000000e+00> : vector<16x128xf32>
    %10 = tpu.matmul %8, %9, %cst_8 {dimension_numbers = #tpu.dot_dimension_numbers<[1], [0], [0], [1], [0, 0, 1, 1], [], []>} : vector<16x64xbf16>, vector<64x128xbf16>, vector<16x128xf32> -> vector<16x128xf32>
    %c0_9 = arith.constant 0 : index
    %c0_10 = arith.constant 0 : index
    %11 = vector.load %arg5[%c0_9, %c0_10] : memref<1x128xf32, #tpu.memory_space<vmem>>, vector<1x128xf32>
    %12 = vector.broadcast %11 : vector<1x128xf32> to vector<16x128xf32>
    %13 = arith.addf %10, %12 : vector<16x128xf32>
    %c0_11 = arith.constant 0 : index
    %c0_12 = arith.constant 0 : index
    %14 = vector.load %arg6[%c0_11, %c0_12] : memref<16x128xf32, #tpu.memory_space<vmem>>, vector<16x128xf32>
    tpu.vector_store %arg6[%c0_11, %c0_12], %13 {strides = array<i32>} : memref<16x128xf32, #tpu.memory_space<vmem>>, vector<16x128xf32>,
    return
  }
  func.func @transform_0(%arg0: i32) -> (i32, i32) {
    %c0_i32 = arith.constant 0 : i32
    %c0_i32_0 = arith.constant 0 : i32
    return %arg0, %c0_i32 : i32, i32
  }
  func.func @transform_1(%arg0: i32) -> (i32, i32) {
    %c0_i32 = arith.constant 0 : i32
    %c0_i32_0 = arith.constant 0 : i32
    %c0_i32_1 = arith.constant 0 : i32
    return %c0_i32, %c0_i32_0 : i32, i32
  }
  func.func @transform_2(%arg0: i32) -> (i32, i32) {
    %c0_i32 = arith.constant 0 : i32
    %c0_i32_0 = arith.constant 0 : i32
    %c0_i32_1 = arith.constant 0 : i32
    return %c0_i32, %c0_i32_0 : i32, i32
  }
  func.func @transform_3(%arg0: i32) -> (i32, i32) {
    %c0_i32 = arith.constant 0 : i32
    %c0_i32_0 = arith.constant 0 : i32
    %c0_i32_1 = arith.constant 0 : i32
    return %c0_i32, %c0_i32_0 : i32, i32
  }
  func.func @transform_4(%arg0: i32) -> (i32, i32) {
    %c0_i32 = arith.constant 0 : i32
    %c0_i32_0 = arith.constant 0 : i32
    %c0_i32_1 = arith.constant 0 : i32
    return %c0_i32, %c0_i32_0 : i32, i32
  }
  func.func @transform_5(%arg0: i32) -> (i32, i32) {
    %c0_i32 = arith.constant 0 : i32
    %c0_i32_0 = arith.constant 0 : i32
    return %arg0, %c0_i32 : i32, i32
  }
}

</mosaic_0001>

<llo_original>
// kernel: timeseries_adapter_forward.1
$region0: #{timeseries_adapter_forward.1}
  #allocation0 [shape = 'u32[]', space=smem, size = 0x4, offset = 0x4, fixed_abs, tag = 'smem constant byte address 0x4 - core index']
  #allocation1 [shape = 'u32[144,128]{1,0:T(1,128)}', space=vmem, size = 0x12000, scoped, tag = 'internal scratch']
  %s0 = inlined_call_operand.vmem [shape: bf16[16,10], index: 0, kind: input, shape index: {}]
  %s1 = inlined_call_operand.vmem [shape: bf16[10,64], index: 1, kind: input, shape index: {}]
  %s2 = inlined_call_operand.vmem [shape: f32[1,64], index: 2, kind: input, shape index: {}]
  %s3 = inlined_call_operand.vmem [shape: bf16[64,128], index: 3, kind: input, shape index: {}]
  %s4 = inlined_call_operand.vmem [shape: f32[1,128], index: 4, kind: input, shape index: {}]
  %s5 = inlined_call_operand.hbm [shape: f32[16,128], index: 5, kind: output, shape index: {}]
  %s6 = sld [smem:[#allocation0]]
  $region30: #{timeseries_adapter_forward.1} parent=0
    _
  %s8 = ssub.s32 1, %s6
  %s9 = scalar_select 0, %s8, %s6
  $region1: #{timeseries_adapter_forward.1} parent=0
    #allocation2 [shape = 'u8[8192]{0}', space=vmem, size = 0x2000, scoped, tag = 'output window, operand 0, single buffered']
    #allocation3 [shape = 's32[1]{0}', space=sflag, size = 0x4, scoped, tag = 'scoped memory for timeseries_adapter_forward.1']
    %10 = vsyncpa [#allocation3], 0
    // Predicated region
    $region2: #{timeseries_adapter_forward.1} parent=1 // pred_check
      _
    $region3: #{timeseries_adapter_forward.1} parent=1 // pred_check_branch
      %12 = sbr.rel (0) target = $region5
    $region4: #{timeseries_adapter_forward.1} parent=1 // pred_region
      _
    $region5: #{timeseries_adapter_forward.1} parent=1 // pred_fallthru
      _
    // Predicated region
    $region6: #{timeseries_adapter_forward.1} parent=1 // pred_check
      _
    $region7: #{timeseries_adapter_forward.1} parent=1 // pred_check_branch
      %14 = sbr.rel (0) target = $region9
    $region8: #{timeseries_adapter_forward.1} parent=1 // pred_region
      _
    $region9: #{timeseries_adapter_forward.1} parent=1 // pred_fallthru
      _
    // Predicated region
    $region10: #{timeseries_adapter_forward.1} parent=1 // pred_check
      _
    $region11: #{timeseries_adapter_forward.1} parent=1 // pred_check_branch
      %16 = sbr.rel (0) target = $region13
    $region12: #{timeseries_adapter_forward.1} parent=1 // pred_region
      _
    $region13: #{timeseries_adapter_forward.1} parent=1 // pred_fallthru
      _
    // Predicated region
    $region14: #{timeseries_adapter_forward.1} parent=1 // pred_check
      _
    $region15: #{timeseries_adapter_forward.1} parent=1 // pred_check_branch
      %18 = sbr.rel (0) target = $region17
    $region16: #{timeseries_adapter_forward.1} parent=1 // pred_region
      _
    $region17: #{timeseries_adapter_forward.1} parent=1 // pred_fallthru
      _
    // Predicated region
    $region18: #{timeseries_adapter_forward.1} parent=1 // pred_check
      _
    $region19: #{timeseries_adapter_forward.1} parent=1 // pred_check_branch
      %20 = sbr.rel (0) target = $region21
    $region20: #{timeseries_adapter_forward.1} parent=1 // pred_region
      _
    $region21: #{timeseries_adapter_forward.1} parent=1 // pred_fallthru
      _
    %v22 = vld [vmem:[%s0] sm:$0xf]
    %v23 = vld [vmem:[%s0 + $0x4] sm:$0xf]
    %v24 = vld [vmem:[%s1] sm:$0xf]
    %v25 = vld [vmem:[%s1 + $0x4] sm:$0x1]
    %v26 = vld [vmem:[%s2] sm:$0x1]
    %v28 = vlaneseq
    %v29 = vshrl.u32 %v28, 7
    %v30 = vsub.s32 0, %v29
    %v31 = vrot.slane %v26, %v30
    %v35 = vunpack.c.l.b16 %v22
    %v36 = vunpack.c.l.b16 %v23
    %v37 = vpack.c.b16 %v36, %v35
    %v40 = vunpack.c.l.b16 %v24
    %v41 = vunpack.c.l.b16 %v25
    %v42 = vpack.c.b16 %v41, %v40
    %vm43 = vcmask 80896
    %v45 = vsel %vm43, %v37, 0
    %vm47 = vcmask 1044480
    %v49 = vsel %vm47, %v42, 0
    %51 = vmatprep.subr.bf16.mxu0 0
    %52 = vmatpush1.bf16.msra.mxu0 0
    %53 = vmatprep.subr.bf16.mxu0 0
    %54 = vmatpush1.bf16.msra.mxu0 0
    %55 = vmatprep.subr.bf16.mxu0 0
    %56 = vmatpush1.bf16.msra.mxu0 0
    %57 = vmatprep.subr.bf16.mxu0 0
    %58 = vmatpush1.bf16.msra.mxu0 0
    %59 = vmatprep.subr.bf16.mxu0 0
    %60 = vmatpush1.bf16.msra.mxu0 0
    %61 = vmatprep.subr.bf16.mxu0 0
    %62 = vmatpush1.bf16.msra.mxu0 0
    %63 = vmatprep.subr.bf16.mxu0 0
    %64 = vmatpush1.bf16.msra.mxu0 0
    %65 = vmatprep.subr.bf16.mxu0 0
    %66 = vmatpush1.bf16.msra.mxu0 %v49
    %67 = vmatprep.subr.bf16.mxu0 0
    %68 = vmatpush2.bf16.msra.mxu0 0
    %69 = vmatprep.subr.bf16.mxu0 0
    %70 = vmatpush2.bf16.msra.mxu0 0
    %71 = vmatprep.subr.bf16.mxu0 0
    %72 = vmatpush2.bf16.msra.mxu0 0
    %73 = vmatprep.subr.bf16.mxu0 0
    %74 = vmatpush2.bf16.msra.mxu0 0
    %75 = vmatprep.subr.bf16.mxu0 0
    %76 = vmatpush2.bf16.msra.mxu0 0
    %77 = vmatprep.subr.bf16.mxu0 0
    %78 = vmatpush2.bf16.msra.mxu0 0
    %79 = vmatprep.subr.bf16.mxu0 0
    %80 = vmatpush2.bf16.msra.mxu0 0
    %81 = vmatprep.subr.bf16.mxu0 0
    %82 = vmatpush2.bf16.msra.mxu0 0
    %83 = vmatprep.mubr.bf16.mxu0 0
    %84 = vmatmul.mubr.bf16.gmra.mxu0 %v45
    %v85 = vpop.f32.mrf.mxu0
    %v86 = vadd.f32 %v31, %v85
    %v87 = vpop.f32.mrf.mxu0
    %v88 = vpop.f32.mrf.mxu0
    %v89 = vadd.f32 %v31, %v88
    %v90 = vpop.f32.mrf.mxu0
    %91 = vdwg.mxu0
    %v92 = vmax.f32 %v86, 0.0
    %v93 = vmax.f32 %v89, 0.0
    %v94 = vpack.c.bf16 %v93, %v92
    %v95 = vld [vmem:[%s3] sm:$0xf]
    %v96 = vld [vmem:[%s3 + $0x4] sm:$0xf]
    %v97 = vld [vmem:[%s3 + $0x8] sm:$0xf]
    %v98 = vld [vmem:[%s3 + $0xc] sm:$0xf]
    %v99 = vld [vmem:[%s3 + $0x10] sm:$0xf]
    %v100 = vld [vmem:[%s3 + $0x14] sm:$0xf]
    %v101 = vld [vmem:[%s3 + $0x18] sm:$0xf]
    %v102 = vld [vmem:[%s3 + $0x1c] sm:$0xf]
    %v103 = vld [vmem:[%s4] sm:$0x1]
    %v105 = vlaneseq
    %v106 = vshrl.u32 %v105, 7
    %v107 = vsub.s32 0, %v106
    %v108 = vrot.slane %v103, %v107
    %v118 = vunpack.c.l.b16 %v95
    %v119 = vunpack.c.l.b16 %v96
    %v120 = vunpack.c.l.b16 %v97
    %v121 = vunpack.c.l.b16 %v98
    %v122 = vunpack.c.l.b16 %v99
    %v123 = vunpack.c.l.b16 %v100
    %v124 = vunpack.c.l.b16 %v101
    %v125 = vunpack.c.l.b16 %v102
    %v126 = vpack.c.b16 %v119, %v118
    %v127 = vpack.c.b16 %v121, %v120
    %v128 = vpack.c.b16 %v123, %v122
    %v129 = vpack.c.b16 %v125, %v124
    %vm134 = vcmask 523264
    %v136 = vsel %vm134, %v94, 0
    %138 = vmatprep.subr.bf16.mxu0 0
    %139 = vmatpush1.bf16.msra.mxu0 0
    %140 = vmatprep.subr.bf16.mxu0 0
    %141 = vmatpush1.bf16.msra.mxu0 0
    %142 = vmatprep.subr.bf16.mxu0 0
    %143 = vmatpush1.bf16.msra.mxu0 0
    %144 = vmatprep.subr.bf16.mxu0 0
    %145 = vmatpush1.bf16.msra.mxu0 0
    %146 = vmatprep.subr.bf16.mxu0 0
    %147 = vmatpush1.bf16.msra.mxu0 %v129
    %148 = vmatprep.subr.bf16.mxu0 0
    %149 = vmatpush1.bf16.msra.mxu0 %v128
    %150 = vmatprep.subr.bf16.mxu0 0
    %151 = vmatpush1.bf16.msra.mxu0 %v127
    %152 = vmatprep.subr.bf16.mxu0 0
    %153 = vmatpush1.bf16.msra.mxu0 %v126
    %154 = vmatprep.subr.bf16.mxu0 0
    %155 = vmatpush2.bf16.msra.mxu0 0
    %156 = vmatprep.subr.bf16.mxu0 0
    %157 = vmatpush2.bf16.msra.mxu0 0
    %158 = vmatprep.subr.bf16.mxu0 0
    %159 = vmatpush2.bf16.msra.mxu0 0
    %160 = vmatprep.subr.bf16.mxu0 0
    %161 = vmatpush2.bf16.msra.mxu0 0
    %162 = vmatprep.subr.bf16.mxu0 0
    %163 = vmatpush2.bf16.msra.mxu0 0
    %164 = vmatprep.subr.bf16.mxu0 0
    %165 = vmatpush2.bf16.msra.mxu0 0
    %166 = vmatprep.subr.bf16.mxu0 0
    %167 = vmatpush2.bf16.msra.mxu0 0
    %168 = vmatprep.subr.bf16.mxu0 0
    %169 = vmatpush2.bf16.msra.mxu0 0
    %170 = vmatprep.mubr.bf16.mxu0 0
    %171 = vmatmul.mubr.bf16.gmra.mxu0 %v136
    %v172 = vpop.f32.mrf.mxu0
    %v173 = vadd.f32 %v108, %v172
    %v174 = vpop.f32.mrf.mxu0
    %v175 = vpop.f32.mrf.mxu0
    %v176 = vadd.f32 %v108, %v175
    %v177 = vpop.f32.mrf.mxu0
    %178 = vdwg.mxu0
    %179 = vst [vmem:[#allocation2] sm:$0xff] %v173
    %180 = vst [vmem:[#allocation2 + $0x8] sm:$0xff] %v176
    // Predicated region
    $region22: #{timeseries_adapter_forward.1} parent=1 // pred_check
      _
    $region23: #{timeseries_adapter_forward.1} parent=1 // pred_check_branch
      %182 = sbr.rel (0) target = $region25
    $region24: #{timeseries_adapter_forward.1} parent=1 // pred_region
      %s184 = ssub.s32 256, 256
      %185 = vsyncadd [#allocation3], %s184
      %s186 = sshll.u32 [#allocation2], 4
      %s187 = int_to_ptr.vmem [resolvable:$true] %s186
      %192 = dma.vmem_to_hbm [thread:$0]  %s187, 256, %s5, [#allocation3], 128, 128, 8
    $region25: #{timeseries_adapter_forward.1} parent=1 // pred_fallthru
      _
    // Predicated region
    $region26: #{timeseries_adapter_forward.1} parent=1 // pred_check
      _
    $region27: #{timeseries_adapter_forward.1} parent=1 // pred_check_branch
      %194 = sbr.rel (0) target = $region29
    $region28: #{timeseries_adapter_forward.1} parent=1 // pred_region
      %195 = dma.done [#allocation3], 256
    $region29: #{timeseries_adapter_forward.1} parent=1 // pred_fallthru
      _
    %196 = vsyncpa [#allocation3], 1

</llo_original>
